<compile_context>
chip_gen: v5e
topology: v5e:2x2
jax: 0.10.0
libtpu: 0.0.40
codegen_flags: <defaults>
</compile_context>

<pallas_src>
import jax
import jax.numpy as jnp
from jax.experimental import pallas as pl
from jax.experimental.pallas import tpu as pltpu

LN_EPS = 1e-5
BN_EPS = 1e-5
LEAKY_SLOPE = 0.1


def _layer_norm(h, gamma, beta):
    mu = jnp.mean(h, axis=-1, keepdims=True)
    var = jnp.mean((h - mu) ** 2, axis=-1, keepdims=True)
    return (h - mu) * jax.lax.rsqrt(var + LN_EPS) * gamma + beta


def _leaky_relu(h):
    return jnp.where(h >= 0, h, LEAKY_SLOPE * h)


def mlp_bn_neck_kernel(
    x_ref,                                # (B, C, hw_tile) spatial tile of NCHW input
    w1_ref, b1_ref, g1_ref, be1_ref,      # ln1: Linear(C, 2C) + LN(2C)
    w2_ref, b2_ref, g2_ref, be2_ref,      # ln2: Linear(2C, 2C) + LN(2C)
    w3_ref,                               # ln3: Linear(2C, Cout), no bias
    wffn_ref,                             # ffn: Linear(C, Cout), no bias
    bng_ref, bnb_ref,                     # BatchNorm1d affine params
    out_ref,                              # (B, Cout)
    pool_acc,                             # VMEM scratch (B, C) f32: running spatial sum
):
    i = pl.program_id(0)

    @pl.when(i == 0)
    def _init():
        pool_acc[...] = jnp.zeros_like(pool_acc)

    # Global-average-pool partial: sum this spatial tile over the lane axis.
    # (The 1/(H*W) scale is folded into w1 / wffn by the wrapper.)
    pool_acc[...] += jnp.sum(x_ref[...].astype(jnp.float32), axis=-1)

    @pl.when(i == pl.num_programs(0) - 1)
    def _finalize():
        pooled = pool_acc[...]            # (B, C) raw spatial sum
        identity = pooled

        def dot(a, w_ref):
            # Cast the activation to the (bf16) weight dtype so the MXU takes
            # narrow inputs; accumulate in f32.
            return jnp.dot(a.astype(w_ref.dtype), w_ref[...],
                           preferred_element_type=jnp.float32)

        # ln1: Linear -> LayerNorm -> LeakyReLU(0.1)
        h = dot(pooled, w1_ref) + b1_ref[...]
        h = _leaky_relu(_layer_norm(h, g1_ref[...], be1_ref[...]))

        # ln2: Linear -> LayerNorm -> LeakyReLU(0.1)
        h = dot(h, w2_ref) + b2_ref[...]
        h = _leaky_relu(_layer_norm(h, g2_ref[...], be2_ref[...]))

        # ln3 (no bias) + ffn skip projection (no bias)
        y = dot(h, w3_ref) + dot(identity, wffn_ref)

        # BatchNorm1d, training-mode semantics (biased batch stats over dim 0).
        # TODO(synk): eval-mode BN (running_mean / running_var) is not implemented.
        mu = jnp.mean(y, axis=0, keepdims=True)
        var = jnp.mean((y - mu) ** 2, axis=0, keepdims=True)
        out = (y - mu) * jax.lax.rsqrt(var + BN_EPS) * bng_ref[...] + bnb_ref[...]

        out_ref[...] = out.astype(out_ref.dtype)


def make_params(key, in_channels, out_channels, dtype=jnp.float32):
    """Deterministic synthetic parameters (shapes match the PyTorch module)."""
    hid = in_channels * 2
    ks = jax.random.split(key, 6)
    return {
        # weights stored as (in_features, out_features) for x @ W
        "w1": jax.random.normal(ks[0], (in_channels, hid), dtype) * 0.05,
        "b1": jax.random.normal(ks[1], (1, hid), dtype) * 0.01,
        "g1": jnp.ones((1, hid), dtype),
        "be1": jnp.zeros((1, hid), dtype),
        "w2": jax.random.normal(ks[2], (hid, hid), dtype) * 0.05,
        "b2": jax.random.normal(ks[3], (1, hid), dtype) * 0.01,
        "g2": jnp.ones((1, hid), dtype),
        "be2": jnp.zeros((1, hid), dtype),
        "w3": jax.random.normal(ks[4], (hid, out_channels), dtype) * 0.05,
        "wffn": jax.random.normal(ks[5], (in_channels, out_channels), dtype) * 0.05,
        "bng": jnp.ones((1, out_channels), dtype),
        "bnb": jnp.zeros((1, out_channels), dtype),
    }


def _prepare_weights(params, hw, weight_dtype):
    """Fold the 1/(H*W) pooling scale into w1/wffn; cast matmul weights."""
    inv = jnp.float32(1.0 / hw)
    return {
        "w1": (params["w1"].astype(jnp.float32) * inv).astype(weight_dtype),
        "w2": params["w2"].astype(weight_dtype),
        "w3": params["w3"].astype(weight_dtype),
        "wffn": (params["wffn"].astype(jnp.float32) * inv).astype(weight_dtype),
        # tiny per-feature vectors stay f32 (negligible bytes, full precision)
        "b1": params["b1"].astype(jnp.float32),
        "g1": params["g1"].astype(jnp.float32),
        "be1": params["be1"].astype(jnp.float32),
        "b2": params["b2"].astype(jnp.float32),
        "g2": params["g2"].astype(jnp.float32),
        "be2": params["be2"].astype(jnp.float32),
        "bng": params["bng"].astype(jnp.float32),
        "bnb": params["bnb"].astype(jnp.float32),
    }


def _pick_hw_tile(B, C, HW, itemsize, budget_bytes=8 << 20):
    """Largest spatial tile that is BlockSpec-legal (multiple of 128 or full
    extent) and keeps one streamed input buffer under `budget_bytes`."""
    if HW % 128 != 0:
        return HW                       # single full-extent block
    best = 128
    t = 128
    while t <= HW:
        if HW % t == 0 and B * C * t * itemsize <= budget_bytes:
            best = t
        t += 128
    return best


def _vmem_limit_bytes(B, C, hw_tile, hid, C_out, x_itemsize, w_itemsize):
    x_stream = 2 * B * C * hw_tile * x_itemsize                      # double-buffered
    weights = 2 * w_itemsize * (C * hid + hid * hid + hid * C_out + C * C_out)
    vectors = 2 * 8 * 4 * 8 * max(hid, 128)                          # padded small vecs
    acts = 4 * (4 * B * hid + 4 * B * C_out + 2 * B * C)
    out = 2 * max(B, 8) * max(C_out, 128) * 4
    est = x_stream + weights + vectors + acts + out
    est = int(est * 1.5) + (2 << 20)                                 # headroom
    return min(max(est, 32 << 20), 100 << 20)


def mlp_bn_neck(x_nchw, params, *, weight_dtype=jnp.bfloat16, hw_tile=None):
    """x_nchw: (B, C, H, W) -> (B, out_channels). Whole forward in one Pallas call."""
    B, C, H, W = x_nchw.shape
    HW = H * W
    hid = params["w2"].shape[0]
    C_out = params["w3"].shape[1]

    # Free layout change: collapse spatial dims. Channels stay on sublanes,
    # spatial positions stream over the lane axis (no HBM transpose op).
    x = x_nchw.reshape(B, C, HW)

    if hw_tile is None:
        hw_tile = _pick_hw_tile(B, C, HW, x.dtype.itemsize)
    assert HW % hw_tile == 0, (HW, hw_tile)
    num_tiles = HW // hw_tile

    p = _prepare_weights(params, HW, weight_dtype)

    args = (
        x,
        p["w1"], p["b1"], p["g1"], p["be1"],
        p["w2"], p["b2"], p["g2"], p["be2"],
        p["w3"], p["wffn"],
        p["bng"], p["bnb"],
    )

    def const(arr):
        # Resident (non-streamed) operand: same (full) block every grid step.
        nd = arr.ndim
        return pl.BlockSpec(arr.shape, lambda i, _nd=nd: (0,) * _nd)

    in_specs = [
        pl.BlockSpec((B, C, hw_tile), lambda i: (0, 0, i)),   # streamed spatial tiles
        const(p["w1"]), const(p["b1"]), const(p["g1"]), const(p["be1"]),
        const(p["w2"]), const(p["b2"]), const(p["g2"]), const(p["be2"]),
        const(p["w3"]), const(p["wffn"]),
        const(p["bng"]), const(p["bnb"]),
    ]

    grid_spec = pltpu.PrefetchScalarGridSpec(
        num_scalar_prefetch=0,
        grid=(num_tiles,),
        in_specs=in_specs,
        out_specs=pl.BlockSpec((B, C_out), lambda i: (0, 0)),
        scratch_shapes=[pltpu.VMEM((B, C), jnp.float32)],
    )

    vmem_limit = _vmem_limit_bytes(
        B, C, hw_tile, hid, C_out, x.dtype.itemsize,
        jnp.dtype(weight_dtype).itemsize)

    return pl.pallas_call(
        mlp_bn_neck_kernel,
        out_shape=jax.ShapeDtypeStruct((B, C_out), x_nchw.dtype),
        grid_spec=grid_spec,
        compiler_params=pltpu.CompilerParams(
            # spatial-sum axis is a reduction into the scratch accumulator
            dimension_semantics=("arbitrary",),
            vmem_limit_bytes=vmem_limit,
        ),
    )(*args)


def mlp_bn_neck_ref(x_nchw, params, *, weight_dtype=jnp.bfloat16):
    """Pure-JAX reference mirroring the kernel's weight prep (bf16 weights,
    f32 accumulation, 1/(H*W) folded into w1/wffn) so the check is tight."""
    B, C, H, W = x_nchw.shape
    HW = H * W
    p = _prepare_weights(params, HW, weight_dtype)

    pooled = jnp.sum(x_nchw.reshape(B, C, HW).astype(jnp.float32), axis=-1)
    identity = pooled

    def dot(a, w):
        return jnp.dot(a.astype(w.dtype), w, preferred_element_type=jnp.float32)

    def ln(h, g, b):
        mu = jnp.mean(h, axis=-1, keepdims=True)
        var = jnp.mean((h - mu) ** 2, axis=-1, keepdims=True)
        return (h - mu) * jax.lax.rsqrt(var + LN_EPS) * g + b

    def lrelu(h):
        return jnp.where(h >= 0, h, LEAKY_SLOPE * h)

    h = lrelu(ln(dot(pooled, p["w1"]) + p["b1"], p["g1"], p["be1"]))
    h = lrelu(ln(dot(h, p["w2"]) + p["b2"], p["g2"], p["be2"]))
    y = dot(h, p["w3"]) + dot(identity, p["wffn"])

    mu = jnp.mean(y, axis=0, keepdims=True)
    var = jnp.mean((y - mu) ** 2, axis=0, keepdims=True)
    return (y - mu) * jax.lax.rsqrt(var + BN_EPS) * p["bng"] + p["bnb"]


if __name__ == "__main__":
    B, C_in, C_out, H, W = 2, 4, 4, 16, 16

    key = jax.random.PRNGKey(0)
    kx, kp = jax.random.split(key)
    x = jax.random.normal(kx, (B, C_in, H, W), jnp.float32)
    params = make_params(kp, C_in, C_out)

    # hw_tile=128 forces a 2-step grid so the streamed-pooling path
    # (init / accumulate / finalize) is actually exercised at this toy size.
    out = mlp_bn_neck(x, params, hw_tile=128)
    out = jax.block_until_ready(out)

    ref = mlp_bn_neck_ref(x, params)
    assert out.shape == (B, C_out), out.shape
    assert jnp.allclose(out, ref, atol=2e-2, rtol=2e-2), (out, ref)

    print("KERNEL_OK")
</pallas_src>

<mosaic_0001>
module attributes {stable_mosaic.version = 11 : i64} {
  func.func @mlp_bn_neck_kernel(%arg0: i32, %arg1: memref<2x4x128xf32, #tpu.memory_space<vmem>>, %arg2: memref<4x8xbf16, #tpu.memory_space<vmem>>, %arg3: memref<1x8xf32, #tpu.memory_space<vmem>>, %arg4: memref<1x8xf32, #tpu.memory_space<vmem>>, %arg5: memref<1x8xf32, #tpu.memory_space<vmem>>, %arg6: memref<8x8xbf16, #tpu.memory_space<vmem>>, %arg7: memref<1x8xf32, #tpu.memory_space<vmem>>, %arg8: memref<1x8xf32, #tpu.memory_space<vmem>>, %arg9: memref<1x8xf32, #tpu.memory_space<vmem>>, %arg10: memref<8x4xbf16, #tpu.memory_space<vmem>>, %arg11: memref<4x4xbf16, #tpu.memory_space<vmem>>, %arg12: memref<1x4xf32, #tpu.memory_space<vmem>>, %arg13: memref<1x4xf32, #tpu.memory_space<vmem>>, %arg14: memref<2x4xf32, #tpu.memory_space<vmem>>, %arg15: memref<2x4xf32, #tpu.memory_space<vmem>>) attributes {dimension_semantics = [#tpu.dimension_semantics<arbitrary>], iteration_bounds = array<i64: 2>, scalar_prefetch = 0 : i64, scratch_operands = 1 : i64, tpu.core_type = #tpu.core_type<tc>, window_params = [{transform_indices = @transform_0, window_bounds = array<i64: 2, 4, 128>}, {pipeline_mode = #tpu.pipeline_mode<synchronous>, transform_indices = @transform_1, window_bounds = array<i64: 4, 8>}, {pipeline_mode = #tpu.pipeline_mode<synchronous>, transform_indices = @transform_2, window_bounds = array<i64: 1, 8>}, {pipeline_mode = #tpu.pipeline_mode<synchronous>, transform_indices = @transform_3, window_bounds = array<i64: 1, 8>}, {pipeline_mode = #tpu.pipeline_mode<synchronous>, transform_indices = @transform_4, window_bounds = array<i64: 1, 8>}, {pipeline_mode = #tpu.pipeline_mode<synchronous>, transform_indices = @transform_5, window_bounds = array<i64: 8, 8>}, {pipeline_mode = #tpu.pipeline_mode<synchronous>, transform_indices = @transform_6, window_bounds = array<i64: 1, 8>}, {pipeline_mode = #tpu.pipeline_mode<synchronous>, transform_indices = @transform_7, window_bounds = array<i64: 1, 8>}, {pipeline_mode = #tpu.pipeline_mode<synchronous>, transform_indices = @transform_8, window_bounds = array<i64: 1, 8>}, {pipeline_mode = #tpu.pipeline_mode<synchronous>, transform_indices = @transform_9, window_bounds = array<i64: 8, 4>}, {pipeline_mode = #tpu.pipeline_mode<synchronous>, transform_indices = @transform_10, window_bounds = array<i64: 4, 4>}, {pipeline_mode = #tpu.pipeline_mode<synchronous>, transform_indices = @transform_11, window_bounds = array<i64: 1, 4>}, {pipeline_mode = #tpu.pipeline_mode<synchronous>, transform_indices = @transform_12, window_bounds = array<i64: 1, 4>}, {pipeline_mode = #tpu.pipeline_mode<synchronous>, transform_indices = @transform_13, window_bounds = array<i64: 2, 4>}]} {
    %c0_i32 = arith.constant 0 : i32
    %0 = arith.cmpi eq, %arg0, %c0_i32 : i32
    %1 = arith.extui %0 : i1 to i32
    %c0_i32_0 = arith.constant 0 : i32
    %2 = arith.cmpi ne, %1, %c0_i32_0 : i32
    scf.if %2 {
      %cst_8 = arith.constant 0.000000e+00 : f32
      %11 = vector.broadcast %cst_8 : f32 to vector<2x4xf32>
      %c0_9 = arith.constant 0 : index
      %c0_10 = arith.constant 0 : index
      %12 = vector.load %arg15[%c0_9, %c0_10] : memref<2x4xf32, #tpu.memory_space<vmem>>, vector<2x4xf32>
      tpu.vector_store %arg15[%c0_9, %c0_10], %11 {strides = array<i32>} : memref<2x4xf32, #tpu.memory_space<vmem>>, vector<2x4xf32>,
    } else {
    }
    %c0 = arith.constant 0 : index
    %c0_1 = arith.constant 0 : index
    %3 = vector.load %arg15[%c0, %c0_1] : memref<2x4xf32, #tpu.memory_space<vmem>>, vector<2x4xf32>
    %c0_2 = arith.constant 0 : index
    %c0_3 = arith.constant 0 : index
    %c0_4 = arith.constant 0 : index
    %4 = vector.load %arg1[%c0_2, %c0_3, %c0_4] : memref<2x4x128xf32, #tpu.memory_space<vmem>>, vector<2x4x128xf32>
    %cst = arith.constant dense<0.000000e+00> : vector<2x4xf32>
    %5 = vector.multi_reduction <add>, %4, %cst [2] : vector<2x4x128xf32> to vector<2x4xf32>
    %6 = arith.addf %3, %5 : vector<2x4xf32>
    %c0_5 = arith.constant 0 : index
    %c0_6 = arith.constant 0 : index
    %7 = vector.load %arg15[%c0_5, %c0_6] : memref<2x4xf32, #tpu.memory_space<vmem>>, vector<2x4xf32>
    tpu.vector_store %arg15[%c0_5, %c0_6], %6 {strides = array<i32>} : memref<2x4xf32, #tpu.memory_space<vmem>>, vector<2x4xf32>,
    %c1_i32 = arith.constant 1 : i32
    %8 = arith.cmpi eq, %arg0, %c1_i32 : i32
    %9 = arith.extui %8 : i1 to i32
    %c0_i32_7 = arith.constant 0 : i32
    %10 = arith.cmpi ne, %9, %c0_i32_7 : i32
    scf.if %10 {
      %c0_8 = arith.constant 0 : index
      %c0_9 = arith.constant 0 : index
      %11 = vector.load %arg15[%c0_8, %c0_9] : memref<2x4xf32, #tpu.memory_space<vmem>>, vector<2x4xf32>
      %12 = arith.truncf %11 : vector<2x4xf32> to vector<2x4xbf16>
      %c0_10 = arith.constant 0 : index
      %c0_11 = arith.constant 0 : index
      %13 = vector.load %arg2[%c0_10, %c0_11] : memref<4x8xbf16, #tpu.memory_space<vmem>>, vector<4x8xbf16>
      %cst_12 = arith.constant dense<0.000000e+00> : vector<2x8xf32>
      %14 = tpu.matmul %12, %13, %cst_12 {dimension_numbers = #tpu.dot_dimension_numbers<[1], [0], [0], [1], [0, 0, 1, 1], [], []>} : vector<2x4xbf16>, vector<4x8xbf16>, vector<2x8xf32> -> vector<2x8xf32>
      %c0_13 = arith.constant 0 : index
      %c0_14 = arith.constant 0 : index
      %15 = vector.load %arg3[%c0_13, %c0_14] : memref<1x8xf32, #tpu.memory_space<vmem>>, vector<1x8xf32>
      %16 = vector.broadcast %15 : vector<1x8xf32> to vector<2x8xf32>
      %17 = arith.addf %14, %16 : vector<2x8xf32>
      %c0_15 = arith.constant 0 : index
      %c0_16 = arith.constant 0 : index
      %18 = vector.load %arg4[%c0_15, %c0_16] : memref<1x8xf32, #tpu.memory_space<vmem>>, vector<1x8xf32>
      %c0_17 = arith.constant 0 : index
      %c0_18 = arith.constant 0 : index
      %19 = vector.load %arg5[%c0_17, %c0_18] : memref<1x8xf32, #tpu.memory_space<vmem>>, vector<1x8xf32>
      %cst_19 = arith.constant dense<0.000000e+00> : vector<2xf32>
      %20 = vector.multi_reduction <add>, %17, %cst_19 [1] : vector<2x8xf32> to vector<2xf32>
      %21 = vector.shape_cast %20 : vector<2xf32> to vector<2x1xf32>
      %cst_20 = arith.constant 8.000000e+00 : f32
      %22 = vector.broadcast %cst_20 : f32 to vector<2x1xf32>
      %23 = arith.divf %21, %22 : vector<2x1xf32>
      %24 = vector.broadcast %23 : vector<2x1xf32> to vector<2x8xf32>
      %25 = arith.subf %17, %24 : vector<2x8xf32>
      %26 = arith.mulf %25, %25 : vector<2x8xf32>
      %cst_21 = arith.constant dense<0.000000e+00> : vector<2xf32>
      %27 = vector.multi_reduction <add>, %26, %cst_21 [1] : vector<2x8xf32> to vector<2xf32>
      %28 = vector.shape_cast %27 : vector<2xf32> to vector<2x1xf32>
      %cst_22 = arith.constant 8.000000e+00 : f32
      %29 = vector.broadcast %cst_22 : f32 to vector<2x1xf32>
      %30 = arith.divf %28, %29 : vector<2x1xf32>
      %31 = vector.broadcast %23 : vector<2x1xf32> to vector<2x8xf32>
      %32 = arith.subf %17, %31 : vector<2x8xf32>
      %cst_23 = arith.constant 9.99999974E-6 : f32
      %33 = vector.broadcast %cst_23 : f32 to vector<2x1xf32>
      %34 = arith.addf %30, %33 : vector<2x1xf32>
      %35 = math.rsqrt %34 : vector<2x1xf32>
      %36 = vector.broadcast %35 : vector<2x1xf32> to vector<2x8xf32>
      %37 = arith.mulf %32, %36 : vector<2x8xf32>
      %38 = vector.broadcast %18 : vector<1x8xf32> to vector<2x8xf32>
      %39 = arith.mulf %37, %38 : vector<2x8xf32>
      %40 = vector.broadcast %19 : vector<1x8xf32> to vector<2x8xf32>
      %41 = arith.addf %39, %40 : vector<2x8xf32>
      %cst_24 = arith.constant 0.000000e+00 : f32
      %42 = vector.broadcast %cst_24 : f32 to vector<2x8xf32>
      %43 = arith.cmpf oge, %41, %42 : vector<2x8xf32>
      %cst_25 = arith.constant 1.000000e-01 : f32
      %44 = vector.broadcast %cst_25 : f32 to vector<2x8xf32>
      %45 = arith.mulf %44, %41 : vector<2x8xf32>
      %46 = arith.select %43, %41, %45 : vector<2x8xi1>, vector<2x8xf32>
      %47 = arith.truncf %46 : vector<2x8xf32> to vector<2x8xbf16>
      %c0_26 = arith.constant 0 : index
      %c0_27 = arith.constant 0 : index
      %48 = vector.load %arg6[%c0_26, %c0_27] : memref<8x8xbf16, #tpu.memory_space<vmem>>, vector<8x8xbf16>
      %cst_28 = arith.constant dense<0.000000e+00> : vector<2x8xf32>
      %49 = tpu.matmul %47, %48, %cst_28 {dimension_numbers = #tpu.dot_dimension_numbers<[1], [0], [0], [1], [0, 0, 1, 1], [], []>} : vector<2x8xbf16>, vector<8x8xbf16>, vector<2x8xf32> -> vector<2x8xf32>
      %c0_29 = arith.constant 0 : index
      %c0_30 = arith.constant 0 : index
      %50 = vector.load %arg7[%c0_29, %c0_30] : memref<1x8xf32, #tpu.memory_space<vmem>>, vector<1x8xf32>
      %51 = vector.broadcast %50 : vector<1x8xf32> to vector<2x8xf32>
      %52 = arith.addf %49, %51 : vector<2x8xf32>
      %c0_31 = arith.constant 0 : index
      %c0_32 = arith.constant 0 : index
      %53 = vector.load %arg8[%c0_31, %c0_32] : memref<1x8xf32, #tpu.memory_space<vmem>>, vector<1x8xf32>
      %c0_33 = arith.constant 0 : index
      %c0_34 = arith.constant 0 : index
      %54 = vector.load %arg9[%c0_33, %c0_34] : memref<1x8xf32, #tpu.memory_space<vmem>>, vector<1x8xf32>
      %cst_35 = arith.constant dense<0.000000e+00> : vector<2xf32>
      %55 = vector.multi_reduction <add>, %52, %cst_35 [1] : vector<2x8xf32> to vector<2xf32>
      %56 = vector.shape_cast %55 : vector<2xf32> to vector<2x1xf32>
      %cst_36 = arith.constant 8.000000e+00 : f32
      %57 = vector.broadcast %cst_36 : f32 to vector<2x1xf32>
      %58 = arith.divf %56, %57 : vector<2x1xf32>
      %59 = vector.broadcast %58 : vector<2x1xf32> to vector<2x8xf32>
      %60 = arith.subf %52, %59 : vector<2x8xf32>
      %61 = arith.mulf %60, %60 : vector<2x8xf32>
      %cst_37 = arith.constant dense<0.000000e+00> : vector<2xf32>
      %62 = vector.multi_reduction <add>, %61, %cst_37 [1] : vector<2x8xf32> to vector<2xf32>
      %63 = vector.shape_cast %62 : vector<2xf32> to vector<2x1xf32>
      %cst_38 = arith.constant 8.000000e+00 : f32
      %64 = vector.broadcast %cst_38 : f32 to vector<2x1xf32>
      %65 = arith.divf %63, %64 : vector<2x1xf32>
      %66 = vector.broadcast %58 : vector<2x1xf32> to vector<2x8xf32>
      %67 = arith.subf %52, %66 : vector<2x8xf32>
      %cst_39 = arith.constant 9.99999974E-6 : f32
      %68 = vector.broadcast %cst_39 : f32 to vector<2x1xf32>
      %69 = arith.addf %65, %68 : vector<2x1xf32>
      %70 = math.rsqrt %69 : vector<2x1xf32>
      %71 = vector.broadcast %70 : vector<2x1xf32> to vector<2x8xf32>
      %72 = arith.mulf %67, %71 : vector<2x8xf32>
      %73 = vector.broadcast %53 : vector<1x8xf32> to vector<2x8xf32>
      %74 = arith.mulf %72, %73 : vector<2x8xf32>
      %75 = vector.broadcast %54 : vector<1x8xf32> to vector<2x8xf32>
      %76 = arith.addf %74, %75 : vector<2x8xf32>
      %cst_40 = arith.constant 0.000000e+00 : f32
      %77 = vector.broadcast %cst_40 : f32 to vector<2x8xf32>
      %78 = arith.cmpf oge, %76, %77 : vector<2x8xf32>
      %cst_41 = arith.constant 1.000000e-01 : f32
      %79 = vector.broadcast %cst_41 : f32 to vector<2x8xf32>
      %80 = arith.mulf %79, %76 : vector<2x8xf32>
      %81 = arith.select %78, %76, %80 : vector<2x8xi1>, vector<2x8xf32>
      %82 = arith.truncf %81 : vector<2x8xf32> to vector<2x8xbf16>
      %c0_42 = arith.constant 0 : index
      %c0_43 = arith.constant 0 : index
      %83 = vector.load %arg10[%c0_42, %c0_43] : memref<8x4xbf16, #tpu.memory_space<vmem>>, vector<8x4xbf16>
      %cst_44 = arith.constant dense<0.000000e+00> : vector<2x4xf32>
      %84 = tpu.matmul %82, %83, %cst_44 {dimension_numbers = #tpu.dot_dimension_numbers<[1], [0], [0], [1], [0, 0, 1, 1], [], []>} : vector<2x8xbf16>, vector<8x4xbf16>, vector<2x4xf32> -> vector<2x4xf32>
      %85 = arith.truncf %11 : vector<2x4xf32> to vector<2x4xbf16>
      %c0_45 = arith.constant 0 : index
      %c0_46 = arith.constant 0 : index
      %86 = vector.load %arg11[%c0_45, %c0_46] : memref<4x4xbf16, #tpu.memory_space<vmem>>, vector<4x4xbf16>
      %cst_47 = arith.constant dense<0.000000e+00> : vector<2x4xf32>
      %87 = tpu.matmul %85, %86, %cst_47 {dimension_numbers = #tpu.dot_dimension_numbers<[1], [0], [0], [1], [0, 0, 1, 1], [], []>} : vector<2x4xbf16>, vector<4x4xbf16>, vector<2x4xf32> -> vector<2x4xf32>
      %88 = arith.addf %84, %87 : vector<2x4xf32>
      %cst_48 = arith.constant dense<0.000000e+00> : vector<4xf32>
      %89 = vector.multi_reduction <add>, %88, %cst_48 [0] : vector<2x4xf32> to vector<4xf32>
      %90 = vector.shape_cast %89 : vector<4xf32> to vector<1x4xf32>
      %cst_49 = arith.constant 2.000000e+00 : f32
      %91 = vector.broadcast %cst_49 : f32 to vector<1x4xf32>
      %92 = arith.divf %90, %91 : vector<1x4xf32>
      %93 = vector.broadcast %92 : vector<1x4xf32> to vector<2x4xf32>
      %94 = arith.subf %88, %93 : vector<2x4xf32>
      %95 = arith.mulf %94, %94 : vector<2x4xf32>
      %cst_50 = arith.constant dense<0.000000e+00> : vector<4xf32>
      %96 = vector.multi_reduction <add>, %95, %cst_50 [0] : vector<2x4xf32> to vector<4xf32>
      %97 = vector.shape_cast %96 : vector<4xf32> to vector<1x4xf32>
      %cst_51 = arith.constant 2.000000e+00 : f32
      %98 = vector.broadcast %cst_51 : f32 to vector<1x4xf32>
      %99 = arith.divf %97, %98 : vector<1x4xf32>
      %100 = vector.broadcast %92 : vector<1x4xf32> to vector<2x4xf32>
      %101 = arith.subf %88, %100 : vector<2x4xf32>
      %cst_52 = arith.constant 9.99999974E-6 : f32
      %102 = vector.broadcast %cst_52 : f32 to vector<1x4xf32>
      %103 = arith.addf %99, %102 : vector<1x4xf32>
      %104 = math.rsqrt %103 : vector<1x4xf32>
      %105 = vector.broadcast %104 : vector<1x4xf32> to vector<2x4xf32>
      %106 = arith.mulf %101, %105 : vector<2x4xf32>
      %c0_53 = arith.constant 0 : index
      %c0_54 = arith.constant 0 : index
      %107 = vector.load %arg12[%c0_53, %c0_54] : memref<1x4xf32, #tpu.memory_space<vmem>>, vector<1x4xf32>
      %108 = vector.broadcast %107 : vector<1x4xf32> to vector<2x4xf32>
      %109 = arith.mulf %106, %108 : vector<2x4xf32>
      %c0_55 = arith.constant 0 : index
      %c0_56 = arith.constant 0 : index
      %110 = vector.load %arg13[%c0_55, %c0_56] : memref<1x4xf32, #tpu.memory_space<vmem>>, vector<1x4xf32>
      %111 = vector.broadcast %110 : vector<1x4xf32> to vector<2x4xf32>
      %112 = arith.addf %109, %111 : vector<2x4xf32>
      %c0_57 = arith.constant 0 : index
      %c0_58 = arith.constant 0 : index
      %113 = vector.load %arg14[%c0_57, %c0_58] : memref<2x4xf32, #tpu.memory_space<vmem>>, vector<2x4xf32>
      tpu.vector_store %arg14[%c0_57, %c0_58], %112 {strides = array<i32>} : memref<2x4xf32, #tpu.memory_space<vmem>>, vector<2x4xf32>,
    } else {
    }
    return
  }
  func.func @transform_0(%arg0: i32) -> (i32, i32, i32) {
    %c0_i32 = arith.constant 0 : i32
    %c0_i32_0 = arith.constant 0 : i32
    %c0_i32_1 = arith.constant 0 : i32
    return %c0_i32, %c0_i32_0, %arg0 : i32, i32, i32
  }
  func.func @transform_1(%arg0: i32) -> (i32, i32) {
    %c0_i32 = arith.constant 0 : i32
    %c0_i32_0 = arith.constant 0 : i32
    %c0_i32_1 = arith.constant 0 : i32
    return %c0_i32, %c0_i32_0 : i32, i32
  }
  func.func @transform_2(%arg0: i32) -> (i32, i32) {
    %c0_i32 = arith.constant 0 : i32
    %c0_i32_0 = arith.constant 0 : i32
    %c0_i32_1 = arith.constant 0 : i32
    return %c0_i32, %c0_i32_0 : i32, i32
  }
  func.func @transform_3(%arg0: i32) -> (i32, i32) {
    %c0_i32 = arith.constant 0 : i32
    %c0_i32_0 = arith.constant 0 : i32
    %c0_i32_1 = arith.constant 0 : i32
    return %c0_i32, %c0_i32_0 : i32, i32
  }
  func.func @transform_4(%arg0: i32) -> (i32, i32) {
    %c0_i32 = arith.constant 0 : i32
    %c0_i32_0 = arith.constant 0 : i32
    %c0_i32_1 = arith.constant 0 : i32
    return %c0_i32, %c0_i32_0 : i32, i32
  }
  func.func @transform_5(%arg0: i32) -> (i32, i32) {
    %c0_i32 = arith.constant 0 : i32
    %c0_i32_0 = arith.constant 0 : i32
    %c0_i32_1 = arith.constant 0 : i32
    return %c0_i32, %c0_i32_0 : i32, i32
  }
  func.func @transform_6(%arg0: i32) -> (i32, i32) {
    %c0_i32 = arith.constant 0 : i32
    %c0_i32_0 = arith.constant 0 : i32
    %c0_i32_1 = arith.constant 0 : i32
    return %c0_i32, %c0_i32_0 : i32, i32
  }
  func.func @transform_7(%arg0: i32) -> (i32, i32) {
    %c0_i32 = arith.constant 0 : i32
    %c0_i32_0 = arith.constant 0 : i32
    %c0_i32_1 = arith.constant 0 : i32
    return %c0_i32, %c0_i32_0 : i32, i32
  }
  func.func @transform_8(%arg0: i32) -> (i32, i32) {
    %c0_i32 = arith.constant 0 : i32
    %c0_i32_0 = arith.constant 0 : i32
    %c0_i32_1 = arith.constant 0 : i32
    return %c0_i32, %c0_i32_0 : i32, i32
  }
  func.func @transform_9(%arg0: i32) -> (i32, i32) {
    %c0_i32 = arith.constant 0 : i32
    %c0_i32_0 = arith.constant 0 : i32
    %c0_i32_1 = arith.constant 0 : i32
    return %c0_i32, %c0_i32_0 : i32, i32
  }
  func.func @transform_10(%arg0: i32) -> (i32, i32) {
    %c0_i32 = arith.constant 0 : i32
    %c0_i32_0 = arith.constant 0 : i32
    %c0_i32_1 = arith.constant 0 : i32
    return %c0_i32, %c0_i32_0 : i32, i32
  }
  func.func @transform_11(%arg0: i32) -> (i32, i32) {
    %c0_i32 = arith.constant 0 : i32
    %c0_i32_0 = arith.constant 0 : i32
    %c0_i32_1 = arith.constant 0 : i32
    return %c0_i32, %c0_i32_0 : i32, i32
  }
  func.func @transform_12(%arg0: i32) -> (i32, i32) {
    %c0_i32 = arith.constant 0 : i32
    %c0_i32_0 = arith.constant 0 : i32
    %c0_i32_1 = arith.constant 0 : i32
    return %c0_i32, %c0_i32_0 : i32, i32
  }
  func.func @transform_13(%arg0: i32) -> (i32, i32) {
    %c0_i32 = arith.constant 0 : i32
    %c0_i32_0 = arith.constant 0 : i32
    %c0_i32_1 = arith.constant 0 : i32
    return %c0_i32, %c0_i32_0 : i32, i32
  }
}

</mosaic_0001>

<llo_original>
// kernel: tpu_custom_call.1
$region0: #{tpu_custom_call.1}
  #allocation0 [shape = 'u32[]', space=smem, size = 0x4, offset = 0x4, fixed_abs, tag = 'smem constant byte address 0x4 - core index']
  #allocation1 [shape = 'u32[72,128]{1,0:T(1,128)}', space=vmem, size = 0x9000, scoped, tag = 'internal scratch']
  #allocation2 [shape = 'f32[2,4]{1,0:T(2,128)}', space=vmem, size = 0x400, scoped, tag = 'scratch operand']
  %s0 = inlined_call_operand.hbm [shape: f32[2,4,256], index: 0, kind: input, shape index: {}]
  %s1 = inlined_call_operand.vmem [shape: bf16[4,8], index: 1, kind: input, shape index: {}]
  %s2 = inlined_call_operand.hbm [shape: f32[1,8], index: 2, kind: input, shape index: {}]
  %s3 = inlined_call_operand.hbm [shape: f32[1,8], index: 3, kind: input, shape index: {}]
  %s4 = inlined_call_operand.hbm [shape: f32[1,8], index: 4, kind: input, shape index: {}]
  %s5 = inlined_call_operand.vmem [shape: bf16[8,8], index: 5, kind: input, shape index: {}]
  %s6 = inlined_call_operand.vmem [shape: f32[1,8], index: 6, kind: input, shape index: {}]
  %s7 = inlined_call_operand.vmem [shape: f32[1,8], index: 7, kind: input, shape index: {}]
  %s8 = inlined_call_operand.vmem [shape: f32[1,8], index: 8, kind: input, shape index: {}]
  %s9 = inlined_call_operand.vmem [shape: bf16[8,4], index: 9, kind: input, shape index: {}]
  %s10 = inlined_call_operand.vmem [shape: bf16[4,4], index: 10, kind: input, shape index: {}]
  %s11 = inlined_call_operand.vmem [shape: f32[1,4], index: 11, kind: input, shape index: {}]
  %s12 = inlined_call_operand.vmem [shape: f32[1,4], index: 12, kind: input, shape index: {}]
  %s13 = inlined_call_operand.hbm [shape: f32[2,4], index: 13, kind: output, shape index: {}]
  %s14 = sld [smem:[#allocation0]]
  $region109: #{tpu_custom_call.1} parent=0
    _
  %s16 = ssub.s32 1, %s14
  %s17 = scalar_select 0, %s16, %s14
  $region1: #{tpu_custom_call.1} parent=0
    #allocation3 [shape = 'u8[8192]{0}', space=vmem, size = 0x2000, scoped, tag = 'input window, operand 0']
    #allocation4 [shape = 's32[2]{0}', space=sflag, size = 0x8, scoped, tag = 'scoped memory for tpu_custom_call.1']
    #allocation5 [shape = 's32[2]{0}', space=sflag, size = 0x8, scoped, tag = 'scoped memory for tpu_custom_call.1']
    #allocation6 [shape = 'u8[512]{0}', space=vmem, size = 0x400, scoped, tag = 'input window, operand 2, single buffered']
    #allocation7 [shape = 's32[1]{0}', space=sflag, size = 0x4, scoped, tag = 'scoped memory for tpu_custom_call.1']
    #allocation8 [shape = 'u8[512]{0}', space=vmem, size = 0x400, scoped, tag = 'input window, operand 3, single buffered']
    #allocation9 [shape = 'u8[512]{0}', space=vmem, size = 0x400, scoped, tag = 'input window, operand 4, single buffered']
    #allocation10 [shape = 's32[1]{0}', space=sflag, size = 0x4, scoped, tag = 'scoped memory for tpu_custom_call.1']
    #allocation11 [shape = 'u8[1024]{0}', space=vmem, size = 0x400, scoped, tag = 'output window, operand 0, single buffered']
    %18 = vsyncpa [#allocation4], 0
    %s19 = scalar_lea.sflag [#allocation4], 1
    %20 = vsyncpa %s19, 0
    %21 = vsyncpa [#allocation7], 0
    %22 = vsyncpa [#allocation10], 0
    %23 = vsyncpa [#allocation5], 0
    loop: start=0, step=1, limit=4
    $region2: #{tpu_custom_call.1} parent=1 // loop_pre_header
      _
    $region3: #{tpu_custom_call.1} parent=1 // loop_header
      %s25 = sphi 0, %s29
      %p26 = scmp.ge.s32.totalorder %s25, 4
      %s35 = sphi 0, %s37
      %s38 = sphi 0, %s35
      %s39 = sphi 0, %s38
      %s55 = sphi 0, %s39
      %s59 = sphi 0, %s59
      %s61 = sphi 0, %s59
      %s62 = sphi 0, %s61
      %s76 = sphi 0, %s62
      %s80 = sphi 0, %s80
      %s82 = sphi 0, %s80
      %s83 = sphi 0, %s82
      %s97 = sphi 0, %s83
      %s101 = sphi 0, %s101
      %s103 = sphi 0, %s101
      %s104 = sphi 0, %s103
      %s118 = sphi 0, %s104
      %s122 = sphi 0, %s122
      %s124 = sphi 0, %s122
      %s125 = sphi 0, %s124
      %s139 = sphi 0, %s125
      %s143 = sphi 0, %s143
      %s145 = sphi 0, %s143
      %s146 = sphi 0, %s145
      %s160 = sphi 0, %s146
      %s164 = sphi 0, %s164
      %s166 = sphi 0, %s164
      %s167 = sphi 0, %s166
      %s181 = sphi 0, %s167
      %s185 = sphi 0, %s185
      %s187 = sphi 0, %s185
      %s188 = sphi 0, %s187
      %s202 = sphi 0, %s188
      %s206 = sphi 0, %s206
      %s208 = sphi 0, %s206
      %s209 = sphi 0, %s208
      %s223 = sphi 0, %s209
      %s227 = sphi 0, %s227
      %s229 = sphi 0, %s227
      %s230 = sphi 0, %s229
      %s244 = sphi 0, %s230
      %s248 = sphi 0, %s248
      %s250 = sphi 0, %s248
      %s251 = sphi 0, %s250
      %s265 = sphi 0, %s251
      %s269 = sphi 0, %s269
      %s271 = sphi 0, %s269
      %s272 = sphi 0, %s271
      %s286 = sphi 0, %s272
      %s290 = sphi 0, %s290
      %s292 = sphi 0, %s290
      %s293 = sphi 0, %s292
      %s307 = sphi 0, %s293
      %s311 = sphi 0, %s311
      %s313 = sphi 0, %s311
      %s314 = sphi 0, %s313
      %s328 = sphi 0, %s314
    $region4: #{tpu_custom_call.1} parent=1 // loop_header_branch
      %28 = sbr.rel (%p26) target = $region8
    $region5: #{tpu_custom_call.1} parent=1 // loop_body
      %s30 = ssub.s32 %s25, 1
      %s31 = ssub.s32 %s25, 2
      %s32 = sadd.s32 %s25, 1
      %s33 = ssub.s32 %s25, %s32
      %p34 = scmp.eq.s32.totalorder %s33, 0
      %s36 = sadd.s32 %s35, 1
      %s37 = scalar_select %p34, %s35, %s36
      %p40 = pneg %p34
      %p41 = scmp.eq.s32.totalorder %s25, 1
      %p42 = por %p40, %p41
      %p43 = scmp.ne.s32.totalorder %s35, %s38
      %p44 = scmp.eq.s32.totalorder %s25, 0
      %p45 = por %p43, %p44
      %p46 = scmp.ne.s32.totalorder %s35, %s38
      %p47 = scmp.eq.s32.totalorder %s30, 1
      %p48 = por %p46, %p47
      %p49 = scmp.ne.s32.totalorder %s38, %s39
      %p50 = scmp.eq.s32.totalorder %s30, 0
      %p51 = por %p49, %p50
      %p52 = scmp.ne.s32.totalorder %s38, %s39
      %p53 = scmp.eq.s32.totalorder %s31, 1
      %p54 = por %p52, %p53
      %p56 = scmp.ne.s32.totalorder %s39, %s55
      %p57 = scmp.eq.s32.totalorder %s31, 0
      %p58 = por %p56, %p57
      %s60 = sadd.s32 %s59, 1
      %p63 = scmp.eq.s32.totalorder %s25, 1
      %p64 = scmp.ne.s32.totalorder %s59, %s61
      %p65 = scmp.eq.s32.totalorder %s25, 0
      %p66 = por %p64, %p65
      %p67 = scmp.ne.s32.totalorder %s59, %s61
      %p68 = scmp.eq.s32.totalorder %s30, 1
      %p69 = por %p67, %p68
      %p70 = scmp.ne.s32.totalorder %s61, %s62
      %p71 = scmp.eq.s32.totalorder %s30, 0
      %p72 = por %p70, %p71
      %p73 = scmp.ne.s32.totalorder %s61, %s62
      %p74 = scmp.eq.s32.totalorder %s31, 1
      %p75 = por %p73, %p74
      %p77 = scmp.ne.s32.totalorder %s62, %s76
      %p78 = scmp.eq.s32.totalorder %s31, 0
      %p79 = por %p77, %p78
      %s81 = sadd.s32 %s80, 1
      %p84 = scmp.eq.s32.totalorder %s25, 1
      %p85 = scmp.ne.s32.totalorder %s80, %s82
      %p86 = scmp.eq.s32.totalorder %s25, 0
      %p87 = por %p85, %p86
      %p88 = scmp.ne.s32.totalorder %s80, %s82
      %p89 = scmp.eq.s32.totalorder %s30, 1
      %p90 = por %p88, %p89
      %p91 = scmp.ne.s32.totalorder %s82, %s83
      %p92 = scmp.eq.s32.totalorder %s30, 0
      %p93 = por %p91, %p92
      %p94 = scmp.ne.s32.totalorder %s82, %s83
      %p95 = scmp.eq.s32.totalorder %s31, 1
      %p96 = por %p94, %p95
      %p98 = scmp.ne.s32.totalorder %s83, %s97
      %p99 = scmp.eq.s32.totalorder %s31, 0
      %p100 = por %p98, %p99
      %s102 = sadd.s32 %s101, 1
      %p105 = scmp.eq.s32.totalorder %s25, 1
      %p106 = scmp.ne.s32.totalorder %s101, %s103
      %p107 = scmp.eq.s32.totalorder %s25, 0
      %p108 = por %p106, %p107
      %p109 = scmp.ne.s32.totalorder %s101, %s103
      %p110 = scmp.eq.s32.totalorder %s30, 1
      %p111 = por %p109, %p110
      %p112 = scmp.ne.s32.totalorder %s103, %s104
      %p113 = scmp.eq.s32.totalorder %s30, 0
      %p114 = por %p112, %p113
      %p115 = scmp.ne.s32.totalorder %s103, %s104
      %p116 = scmp.eq.s32.totalorder %s31, 1
      %p117 = por %p115, %p116
      %p119 = scmp.ne.s32.totalorder %s104, %s118
      %p120 = scmp.eq.s32.totalorder %s31, 0
      %p121 = por %p119, %p120
      %s123 = sadd.s32 %s122, 1
      %p126 = scmp.eq.s32.totalorder %s25, 1
      %p127 = scmp.ne.s32.totalorder %s122, %s124
      %p128 = scmp.eq.s32.totalorder %s25, 0
      %p129 = por %p127, %p128
      %p130 = scmp.ne.s32.totalorder %s122, %s124
      %p131 = scmp.eq.s32.totalorder %s30, 1
      %p132 = por %p130, %p131
      %p133 = scmp.ne.s32.totalorder %s124, %s125
      %p134 = scmp.eq.s32.totalorder %s30, 0
      %p135 = por %p133, %p134
      %p136 = scmp.ne.s32.totalorder %s124, %s125
      %p137 = scmp.eq.s32.totalorder %s31, 1
      %p138 = por %p136, %p137
      %p140 = scmp.ne.s32.totalorder %s125, %s139
      %p141 = scmp.eq.s32.totalorder %s31, 0
      %p142 = por %p140, %p141
      %s144 = sadd.s32 %s143, 1
      %p147 = scmp.eq.s32.totalorder %s25, 1
      %p148 = scmp.ne.s32.totalorder %s143, %s145
      %p149 = scmp.eq.s32.totalorder %s25, 0
      %p150 = por %p148, %p149
      %p151 = scmp.ne.s32.totalorder %s143, %s145
      %p152 = scmp.eq.s32.totalorder %s30, 1
      %p153 = por %p151, %p152
      %p154 = scmp.ne.s32.totalorder %s145, %s146
      %p155 = scmp.eq.s32.totalorder %s30, 0
      %p156 = por %p154, %p155
      %p157 = scmp.ne.s32.totalorder %s145, %s146
      %p158 = scmp.eq.s32.totalorder %s31, 1
      %p159 = por %p157, %p158
      %p161 = scmp.ne.s32.totalorder %s146, %s160
      %p162 = scmp.eq.s32.totalorder %s31, 0
      %p163 = por %p161, %p162
      %s165 = sadd.s32 %s164, 1
      %p168 = scmp.eq.s32.totalorder %s25, 1
      %p169 = scmp.ne.s32.totalorder %s164, %s166
      %p170 = scmp.eq.s32.totalorder %s25, 0
      %p171 = por %p169, %p170
      %p172 = scmp.ne.s32.totalorder %s164, %s166
      %p173 = scmp.eq.s32.totalorder %s30, 1
      %p174 = por %p172, %p173
      %p175 = scmp.ne.s32.totalorder %s166, %s167
      %p176 = scmp.eq.s32.totalorder %s30, 0
      %p177 = por %p175, %p176
      %p178 = scmp.ne.s32.totalorder %s166, %s167
      %p179 = scmp.eq.s32.totalorder %s31, 1
      %p180 = por %p178, %p179
      %p182 = scmp.ne.s32.totalorder %s167, %s181
      %p183 = scmp.eq.s32.totalorder %s31, 0
      %p184 = por %p182, %p183
      %s186 = sadd.s32 %s185, 1
      %p189 = scmp.eq.s32.totalorder %s25, 1
      %p190 = scmp.ne.s32.totalorder %s185, %s187
      %p191 = scmp.eq.s32.totalorder %s25, 0
      %p192 = por %p190, %p191
      %p193 = scmp.ne.s32.totalorder %s185, %s187
      %p194 = scmp.eq.s32.totalorder %s30, 1
      %p195 = por %p193, %p194
      %p196 = scmp.ne.s32.totalorder %s187, %s188
      %p197 = scmp.eq.s32.totalorder %s30, 0
      %p198 = por %p196, %p197
      %p199 = scmp.ne.s32.totalorder %s187, %s188
      %p200 = scmp.eq.s32.totalorder %s31, 1
      %p201 = por %p199, %p200
      %p203 = scmp.ne.s32.totalorder %s188, %s202
      %p204 = scmp.eq.s32.totalorder %s31, 0
      %p205 = por %p203, %p204
      %s207 = sadd.s32 %s206, 1
      %p210 = scmp.eq.s32.totalorder %s25, 1
      %p211 = scmp.ne.s32.totalorder %s206, %s208
      %p212 = scmp.eq.s32.totalorder %s25, 0
      %p213 = por %p211, %p212
      %p214 = scmp.ne.s32.totalorder %s206, %s208
      %p215 = scmp.eq.s32.totalorder %s30, 1
      %p216 = por %p214, %p215
      %p217 = scmp.ne.s32.totalorder %s208, %s209
      %p218 = scmp.eq.s32.totalorder %s30, 0
      %p219 = por %p217, %p218
      %p220 = scmp.ne.s32.totalorder %s208, %s209
      %p221 = scmp.eq.s32.totalorder %s31, 1
      %p222 = por %p220, %p221
      %p224 = scmp.ne.s32.totalorder %s209, %s223
      %p225 = scmp.eq.s32.totalorder %s31, 0
      %p226 = por %p224, %p225
      %s228 = sadd.s32 %s227, 1
      %p231 = scmp.eq.s32.totalorder %s25, 1
      %p232 = scmp.ne.s32.totalorder %s227, %s229
      %p233 = scmp.eq.s32.totalorder %s25, 0
      %p234 = por %p232, %p233
      %p235 = scmp.ne.s32.totalorder %s227, %s229
      %p236 = scmp.eq.s32.totalorder %s30, 1
      %p237 = por %p235, %p236
      %p238 = scmp.ne.s32.totalorder %s229, %s230
      %p239 = scmp.eq.s32.totalorder %s30, 0
      %p240 = por %p238, %p239
      %p241 = scmp.ne.s32.totalorder %s229, %s230
      %p242 = scmp.eq.s32.totalorder %s31, 1
      %p243 = por %p241, %p242
      %p245 = scmp.ne.s32.totalorder %s230, %s244
      %p246 = scmp.eq.s32.totalorder %s31, 0
      %p247 = por %p245, %p246
      %s249 = sadd.s32 %s248, 1
      %p252 = scmp.eq.s32.totalorder %s25, 1
      %p253 = scmp.ne.s32.totalorder %s248, %s250
      %p254 = scmp.eq.s32.totalorder %s25, 0
      %p255 = por %p253, %p254
      %p256 = scmp.ne.s32.totalorder %s248, %s250
      %p257 = scmp.eq.s32.totalorder %s30, 1
      %p258 = por %p256, %p257
      %p259 = scmp.ne.s32.totalorder %s250, %s251
      %p260 = scmp.eq.s32.totalorder %s30, 0
      %p261 = por %p259, %p260
      %p262 = scmp.ne.s32.totalorder %s250, %s251
      %p263 = scmp.eq.s32.totalorder %s31, 1
      %p264 = por %p262, %p263
      %p266 = scmp.ne.s32.totalorder %s251, %s265
      %p267 = scmp.eq.s32.totalorder %s31, 0
      %p268 = por %p266, %p267
      %s270 = sadd.s32 %s269, 1
      %p273 = scmp.eq.s32.totalorder %s25, 1
      %p274 = scmp.ne.s32.totalorder %s269, %s271
      %p275 = scmp.eq.s32.totalorder %s25, 0
      %p276 = por %p274, %p275
      %p277 = scmp.ne.s32.totalorder %s269, %s271
      %p278 = scmp.eq.s32.totalorder %s30, 1
      %p279 = por %p277, %p278
      %p280 = scmp.ne.s32.totalorder %s271, %s272
      %p281 = scmp.eq.s32.totalorder %s30, 0
      %p282 = por %p280, %p281
      %p283 = scmp.ne.s32.totalorder %s271, %s272
      %p284 = scmp.eq.s32.totalorder %s31, 1
      %p285 = por %p283, %p284
      %p287 = scmp.ne.s32.totalorder %s272, %s286
      %p288 = scmp.eq.s32.totalorder %s31, 0
      %p289 = por %p287, %p288
      %s291 = sadd.s32 %s290, 1
      %p294 = scmp.eq.s32.totalorder %s25, 1
      %p295 = scmp.ne.s32.totalorder %s290, %s292
      %p296 = scmp.eq.s32.totalorder %s25, 0
      %p297 = por %p295, %p296
      %p298 = scmp.ne.s32.totalorder %s290, %s292
      %p299 = scmp.eq.s32.totalorder %s30, 1
      %p300 = por %p298, %p299
      %p301 = scmp.ne.s32.totalorder %s292, %s293
      %p302 = scmp.eq.s32.totalorder %s30, 0
      %p303 = por %p301, %p302
      %p304 = scmp.ne.s32.totalorder %s292, %s293
      %p305 = scmp.eq.s32.totalorder %s31, 1
      %p306 = por %p304, %p305
      %p308 = scmp.ne.s32.totalorder %s293, %s307
      %p309 = scmp.eq.s32.totalorder %s31, 0
      %p310 = por %p308, %p309
      %s312 = sadd.s32 %s311, 1
      %p315 = scmp.eq.s32.totalorder %s25, 1
      %p316 = scmp.ne.s32.totalorder %s311, %s313
      %p317 = scmp.eq.s32.totalorder %s25, 0
      %p318 = por %p316, %p317
      %p319 = scmp.ne.s32.totalorder %s311, %s313
      %p320 = scmp.eq.s32.totalorder %s30, 1
      %p321 = por %p319, %p320
      %p322 = scmp.ne.s32.totalorder %s313, %s314
      %p323 = scmp.eq.s32.totalorder %s30, 0
      %p324 = por %p322, %p323
      %p325 = scmp.ne.s32.totalorder %s313, %s314
      %p326 = scmp.eq.s32.totalorder %s31, 1
      %p327 = por %p325, %p326
      %p329 = scmp.ne.s32.totalorder %s314, %s328
      %p330 = scmp.eq.s32.totalorder %s31, 0
      %p331 = por %p329, %p330
      %p332 = scmp.le.s32.totalorder 1, %s25
      %p333 = scmp.lt.s32.totalorder %s25, 3
      %p334 = pnand %p332, %p333
      %p335 = pneg %p334
      // Predicated region
      $region9: #{tpu_custom_call.1} parent=5 // pred_check
        _
      $region10: #{tpu_custom_call.1} parent=5 // pred_check_branch
        %337 = sbr.rel (%p334) target = $region12
      $region11: #{tpu_custom_call.1} parent=5 // pred_region
        %s338 = ssub.s32 %s25, 1
        // Predicated region
        $region13: #{tpu_custom_call.1} parent=11 // pred_check
          %p339 = pneg %p72
        $region14: #{tpu_custom_call.1} parent=11 // pred_check_branch
          %341 = sbr.rel (%p339) target = $region16
        $region15: #{tpu_custom_call.1} parent=11 // pred_region
          _
        $region16: #{tpu_custom_call.1} parent=11 // pred_fallthru
          _
        // Predicated region
        $region17: #{tpu_custom_call.1} parent=11 // pred_check
          %p342 = pneg %p93
        $region18: #{tpu_custom_call.1} parent=11 // pred_check_branch
          %344 = sbr.rel (%p342) target = $region20
        $region19: #{tpu_custom_call.1} parent=11 // pred_region
          %346 = vsyncadd [#allocation7], 0
          %s348 = sshll.u32 %s2, 4
          %s349 = int_to_ptr.hbm [resolvable:$true] %s348
          %s350 = sshll.u32 [#allocation6], 4
          %s351 = int_to_ptr.vmem [resolvable:$true] %s350
          %353 = dma.hbm_to_vmem [thread:$0]  %s349, 16, %s351, [#allocation7]
        $region20: #{tpu_custom_call.1} parent=11 // pred_fallthru
          _
        // Predicated region
        $region21: #{tpu_custom_call.1} parent=11 // pred_check
          %p354 = pneg %p114
        $region22: #{tpu_custom_call.1} parent=11 // pred_check_branch
          %356 = sbr.rel (%p354) target = $region24
        $region23: #{tpu_custom_call.1} parent=11 // pred_region
          %358 = vsyncadd [#allocation7], 0
          %s360 = sshll.u32 %s3, 4
          %s361 = int_to_ptr.hbm [resolvable:$true] %s360
          %s362 = sshll.u32 [#allocation8], 4
          %s363 = int_to_ptr.vmem [resolvable:$true] %s362
          %365 = dma.hbm_to_vmem [thread:$0]  %s361, 16, %s363, [#allocation7]
        $region24: #{tpu_custom_call.1} parent=11 // pred_fallthru
          _
        // Predicated region
        $region25: #{tpu_custom_call.1} parent=11 // pred_check
          %p366 = pneg %p135
        $region26: #{tpu_custom_call.1} parent=11 // pred_check_branch
          %368 = sbr.rel (%p366) target = $region28
        $region27: #{tpu_custom_call.1} parent=11 // pred_region
          %370 = vsyncadd [#allocation10], 0
          %s372 = sshll.u32 %s4, 4
          %s373 = int_to_ptr.hbm [resolvable:$true] %s372
          %s374 = sshll.u32 [#allocation9], 4
          %s375 = int_to_ptr.vmem [resolvable:$true] %s374
          %377 = dma.hbm_to_vmem [thread:$0]  %s373, 16, %s375, [#allocation10]
        $region28: #{tpu_custom_call.1} parent=11 // pred_fallthru
          _
        // Predicated region
        $region29: #{tpu_custom_call.1} parent=11 // pred_check
          %p378 = pneg %p156
        $region30: #{tpu_custom_call.1} parent=11 // pred_check_branch
          %380 = sbr.rel (%p378) target = $region32
        $region31: #{tpu_custom_call.1} parent=11 // pred_region
          _
        $region32: #{tpu_custom_call.1} parent=11 // pred_fallthru
          _
        // Predicated region
        $region33: #{tpu_custom_call.1} parent=11 // pred_check
          %p381 = pneg %p177
        $region34: #{tpu_custom_call.1} parent=11 // pred_check_branch
          %383 = sbr.rel (%p381) target = $region36
        $region35: #{tpu_custom_call.1} parent=11 // pred_region
          _
        $region36: #{tpu_custom_call.1} parent=11 // pred_fallthru
          _
        // Predicated region
        $region37: #{tpu_custom_call.1} parent=11 // pred_check
          %p384 = pneg %p198
        $region38: #{tpu_custom_call.1} parent=11 // pred_check_branch
          %386 = sbr.rel (%p384) target = $region40
        $region39: #{tpu_custom_call.1} parent=11 // pred_region
          _
        $region40: #{tpu_custom_call.1} parent=11 // pred_fallthru
          _
        // Predicated region
        $region41: #{tpu_custom_call.1} parent=11 // pred_check
          %p387 = pneg %p219
        $region42: #{tpu_custom_call.1} parent=11 // pred_check_branch
          %389 = sbr.rel (%p387) target = $region44
        $region43: #{tpu_custom_call.1} parent=11 // pred_region
          _
        $region44: #{tpu_custom_call.1} parent=11 // pred_fallthru
          _
        // Predicated region
        $region45: #{tpu_custom_call.1} parent=11 // pred_check
          %p390 = pneg %p240
        $region46: #{tpu_custom_call.1} parent=11 // pred_check_branch
          %392 = sbr.rel (%p390) target = $region48
        $region47: #{tpu_custom_call.1} parent=11 // pred_region
          _
        $region48: #{tpu_custom_call.1} parent=11 // pred_fallthru
          _
        // Predicated region
        $region49: #{tpu_custom_call.1} parent=11 // pred_check
          %p393 = pneg %p261
        $region50: #{tpu_custom_call.1} parent=11 // pred_check_branch
          %395 = sbr.rel (%p393) target = $region52
        $region51: #{tpu_custom_call.1} parent=11 // pred_region
          _
        $region52: #{tpu_custom_call.1} parent=11 // pred_fallthru
          _
        // Predicated region
        $region53: #{tpu_custom_call.1} parent=11 // pred_check
          %p396 = pneg %p282
        $region54: #{tpu_custom_call.1} parent=11 // pred_check_branch
          %398 = sbr.rel (%p396) target = $region56
        $region55: #{tpu_custom_call.1} parent=11 // pred_region
          _
        $region56: #{tpu_custom_call.1} parent=11 // pred_fallthru
          _
        // Predicated region
        $region57: #{tpu_custom_call.1} parent=11 // pred_check
          %p399 = pneg %p303
        $region58: #{tpu_custom_call.1} parent=11 // pred_check_branch
          %401 = sbr.rel (%p399) target = $region60
        $region59: #{tpu_custom_call.1} parent=11 // pred_region
          _
        $region60: #{tpu_custom_call.1} parent=11 // pred_fallthru
          _
      $region12: #{tpu_custom_call.1} parent=5 // pred_fallthru
        _
      %p402 = scmp.lt.s32.totalorder %s25, 2
      // Predicated region
      $region61: #{tpu_custom_call.1} parent=5 // pred_check
        %p403 = pneg %p402
      $region62: #{tpu_custom_call.1} parent=5 // pred_check_branch
        %405 = sbr.rel (%p403) target = $region64
      $region63: #{tpu_custom_call.1} parent=5 // pred_region
        // Predicated region
        $region65: #{tpu_custom_call.1} parent=63 // pred_check
          %p406 = pneg %p45
        $region66: #{tpu_custom_call.1} parent=63 // pred_check_branch
          %408 = sbr.rel (%p406) target = $region68
        $region67: #{tpu_custom_call.1} parent=63 // pred_region
          %s409 = sand.u32 %s35, 1
          %s410 = scalar_lea.sflag [#allocation4], %s409
          %s411 = sand.u32 %s35, 1
          %s412 = smul.addr %s411, 8
          %s413 = scalar_lea.vmem [#allocation3], %s412
          %415 = vsyncadd %s410, 0
          %s416 = smul.addr %s25, 4
          %s417 = scalar_lea.hbm %s0, %s416
          %s418 = sshll.u32 %s417, 4
          %s419 = int_to_ptr.hbm [resolvable:$true] %s418
          %s420 = sshll.u32 %s413, 4
          %s421 = int_to_ptr.vmem [resolvable:$true] %s420
          %426 = dma.hbm_to_vmem [thread:$0]  %s419, 128, %s421, %s410, 128, 64, 4
        $region68: #{tpu_custom_call.1} parent=63 // pred_fallthru
          _
      $region64: #{tpu_custom_call.1} parent=5 // pred_fallthru
        _
      %p427 = scmp.le.s32.totalorder 1, %s25
      %p428 = scmp.lt.s32.totalorder %s25, 3
      %p429 = pnand %p427, %p428
      %p430 = pneg %p429
      // Predicated region
      $region69: #{tpu_custom_call.1} parent=5 // pred_check
        _
      $region70: #{tpu_custom_call.1} parent=5 // pred_check_branch
        %432 = sbr.rel (%p429) target = $region72
      $region71: #{tpu_custom_call.1} parent=5 // pred_region
        %s433 = ssub.s32 %s25, 1
        %s434 = sand.u32 %s38, 1
        %s435 = scalar_lea.sflag [#allocation4], %s434
        %s436 = sand.u32 %s38, 1
        %s437 = smul.addr %s436, 8
        %s438 = scalar_lea.vmem [#allocation3], %s437
        // Predicated region
        $region73: #{tpu_custom_call.1} parent=71 // pred_check
          %p439 = pneg %p51
        $region74: #{tpu_custom_call.1} parent=71 // pred_check_branch
          %441 = sbr.rel (%p439) target = $region76
        $region75: #{tpu_custom_call.1} parent=71 // pred_region
          %443 = dma.done %s435, 128
        $region76: #{tpu_custom_call.1} parent=71 // pred_fallthru
          _
        // Predicated region
        $region77: #{tpu_custom_call.1} parent=71 // pred_check
          %p444 = pneg %p93
        $region78: #{tpu_custom_call.1} parent=71 // pred_check_branch
          %446 = sbr.rel (%p444) target = $region80
        $region79: #{tpu_custom_call.1} parent=71 // pred_region
          %448 = dma.done [#allocation7], 16
        $region80: #{tpu_custom_call.1} parent=71 // pred_fallthru
          _
        // Predicated region
        $region81: #{tpu_custom_call.1} parent=71 // pred_check
          %p449 = pneg %p114
        $region82: #{tpu_custom_call.1} parent=71 // pred_check_branch
          %451 = sbr.rel (%p449) target = $region84
        $region83: #{tpu_custom_call.1} parent=71 // pred_region
          %453 = dma.done [#allocation7], 16
        $region84: #{tpu_custom_call.1} parent=71 // pred_fallthru
          _
        // Predicated region
        $region85: #{tpu_custom_call.1} parent=71 // pred_check
          %p454 = pneg %p135
        $region86: #{tpu_custom_call.1} parent=71 // pred_check_branch
          %456 = sbr.rel (%p454) target = $region88
        $region87: #{tpu_custom_call.1} parent=71 // pred_region
          %458 = dma.done [#allocation10], 16
        $region88: #{tpu_custom_call.1} parent=71 // pred_fallthru
          _
        %s459 = sand.u32 %s38, 1
        %s460 = scalar_lea.sflag [#allocation4], %s459
        %s461 = sand.u32 %s38, 1
        %s462 = smul.addr %s461, 8
        %s463 = scalar_lea.vmem [#allocation3], %s462
        %p464 = pneg %p51
        %p465 = pneg %p48
        %p466 = pneg %p72
        %p467 = pneg %p69
        %p468 = pneg %p93
        %p469 = pneg %p90
        %p470 = pneg %p114
        %p471 = pneg %p111
        %p472 = pneg %p135
        %p473 = pneg %p132
        %p474 = pneg %p156
        %p475 = pneg %p153
        %p476 = pneg %p177
        %p477 = pneg %p174
        %p478 = pneg %p198
        %p479 = pneg %p195
        %p480 = pneg %p219
        %p481 = pneg %p216
        %p482 = pneg %p240
        %p483 = pneg %p237
        %p484 = pneg %p261
        %p485 = pneg %p258
        %p486 = pneg %p282
        %p487 = pneg %p279
        %p488 = pneg %p303
        %p489 = pneg %p300
        %p490 = pneg %p324
        %p491 = pneg %p321
        %p493 = scmp.eq.s32.totalorder %s30, 0
        // Predicated region
        $region89: #{tpu_custom_call.1} parent=71 // pred_check
          %p494 = pneg %p493
        $region90: #{tpu_custom_call.1} parent=71 // pred_check_branch
          %496 = sbr.rel (%p494) target = $region92
        $region91: #{tpu_custom_call.1} parent=71 // pred_region
          %vm497 = vcmask 25600
          %498 = vst.msk [vmem:[#allocation2] sm:$0x3] %vm497, 0.0
        $region92: #{tpu_custom_call.1} parent=71 // pred_fallthru
          _
        %v499 = vld [vmem:[#allocation2] sm:$0x3]
        %v500 = vld [vmem:[%s438] sm:$0xf]
        %v501 = vld [vmem:[%s438 + $0x4] sm:$0xf]
        %vm502 = vcmask 1043456
        %v503 = vsel %vm502, %v500, 0.0
        %504 = vadd.xlane.f32.xlu0 %v503
        %v505 = vpop.xlane.xlu0 %504
        %v506 = vsel %vm502, %v501, 0.0
        %507 = vadd.xlane.f32.xlu0 %v506
        %v508 = vpop.xlane.xlu0 %507
        %v511 = vlaneseq
        %v512 = vand.u32 %v511, 127
        %v513 = vperm.slane %v505, %v512
        %v514 = vperm.slane %v508, %v512
        %vm515 = vcmask 1041409
        %v516 = vsel %vm515, %v514, %v513
        %v518 = vadd.f32 %v499, %v516
        %vm519 = vcmask 25600
        %520 = vst.msk [vmem:[#allocation2] sm:$0x3] %vm519, %v518
        %p521 = scmp.eq.s32.totalorder %s30, 1
        // Predicated region
        $region93: #{tpu_custom_call.1} parent=71 // pred_check
          %p522 = pneg %p521
        $region94: #{tpu_custom_call.1} parent=71 // pred_check_branch
          %524 = sbr.rel (%p522) target = $region96
        $region95: #{tpu_custom_call.1} parent=71 // pred_region
          %v525 = vld [vmem:[#allocation2] sm:$0x3]
          %v526 = vpack.c.bf16 %v525, %v525
          %v527 = vld [vmem:[%s1] sm:$0x3]
          %v528 = vld [vmem:[#allocation6] sm:$0x1]
          %v530 = vperm.slane %v528, 0
          %vm532 = vcmask 31744
          %v534 = vsel %vm532, %v526, 0
          %vm536 = vcmask 1041408
          %v538 = vsel %vm536, %v527, 0
          %540 = vmatpush.bf16.msra.mxu0 0
          %541 = vmatpush.bf16.msra.mxu0 0
          %542 = vmatpush.bf16.msra.mxu0 0
          %543 = vmatpush.bf16.msra.mxu0 0
          %544 = vmatpush.bf16.msra.mxu0 0
          %545 = vmatpush.bf16.msra.mxu0 0
          %546 = vmatpush.bf16.msra.mxu0 0
          %547 = vmatpush.bf16.msra.mxu0 %v538
          %548 = vmatmul.bf16.gmra.mxu0 %v534
          %v549 = vpop.f32.mrf.mxu0
          %v550 = vadd.f32 %v530, %v549
          %v551 = vpop.f32.mrf.mxu0
          %552 = vdwg.mxu0
          %v553 = vld [vmem:[#allocation8] sm:$0x1]
          %v554 = vld [vmem:[#allocation9] sm:$0x1]
          %vm555 = vcmask 58368
          %v556 = vsel %vm555, %v550, 0.0
          %557 = vadd.xlane.f32.xlu0 %v556
          %v558 = vpop.xlane.xlu0 %557
          %v559 = vrcp.pop 8.0
          %v560 = vmul.f32 8.0, %v559
          %v561 = vsub.f32 1.0, %v560
          %v562 = vmul.f32 %v559, %v561
          %v563 = vadd.f32 %v559, %v562
          %vm564 = vweird.f32 %v559
          %v565 = vsel %vm564, %v559, %v563
          %v566 = vmul.f32 %v558, %v565
          %v567 = vsub.f32 %v550, %v566
          %v568 = vmul.f32 %v567, %v567
          %v569 = vsel %vm555, %v568, 0.0
          %570 = vadd.xlane.f32.xlu0 %v569
          %v571 = vpop.xlane.xlu0 %570
          %v572 = vmul.f32 %v571, %v565
          %v573 = vadd.f32 %v572, 1e-05
          %v574 = vrsqrt.pop %v573
          %v575 = vmul.f32 %v574, %v573
          %v576 = vmul.f32 %v575, %v574
          %v577 = vmul.f32 0.5, %v576
          %v578 = vsub.f32 1.5, %v577
          %v579 = vmul.f32 %v574, %v578
          %vm580 = vweird.f32 %v573
          %vm581 = vweird.f32 %v574
          %vm582 = vmor %vm580, %vm581
          %v583 = vsel %vm582, %v574, %v579
          %v584 = vmul.f32 %v567, %v583
          %v586 = vperm.slane %v553, 0
          %v588 = vmul.f32 %v584, %v586
          %v590 = vperm.slane %v554, 0
          %v592 = vadd.f32 %v588, %v590
          %vm593 = vcmp.ge.f32.partialorder %v592, 0.0
          %v594 = vmul.f32 %v592, 0.1
          %v595 = vsel %vm593, %v592, %v594
          %v596 = vpack.c.bf16 %v595, %v595
          %v597 = vld [vmem:[%s5] sm:$0xf]
          %v598 = vld [vmem:[%s6] sm:$0x1]
          %v600 = vperm.slane %v598, 0
          %vm602 = vcmask 64512
          %v604 = vsel %vm602, %v596, 0
          %v607 = vsel %vm502, %v597, 0
          %609 = vmatpush.bf16.msra.mxu0 0
          %610 = vmatpush.bf16.msra.mxu0 0
          %611 = vmatpush.bf16.msra.mxu0 0
          %612 = vmatpush.bf16.msra.mxu0 0
          %613 = vmatpush.bf16.msra.mxu0 0
          %614 = vmatpush.bf16.msra.mxu0 0
          %615 = vmatpush.bf16.msra.mxu0 0
          %616 = vmatpush.bf16.msra.mxu0 %v607
          %617 = vmatmul.bf16.gmra.mxu0 %v604
          %v618 = vpop.f32.mrf.mxu0
          %v619 = vadd.f32 %v600, %v618
          %v620 = vpop.f32.mrf.mxu0
          %621 = vdwg.mxu0
          %v622 = vld [vmem:[%s7] sm:$0x1]
          %v623 = vld [vmem:[%s8] sm:$0x1]
          %v624 = vsel %vm555, %v619, 0.0
          %625 = vadd.xlane.f32.xlu0 %v624
          %v626 = vpop.xlane.xlu0 %625
          %v627 = vmul.f32 %v626, %v565
          %v628 = vsub.f32 %v619, %v627
          %v629 = vmul.f32 %v628, %v628
          %v630 = vsel %vm555, %v629, 0.0
          %631 = vadd.xlane.f32.xlu0 %v630
          %v632 = vpop.xlane.xlu0 %631
          %v633 = vmul.f32 %v632, %v565
          %v634 = vadd.f32 %v633, 1e-05
          %v635 = vrsqrt.pop %v634
          %v636 = vmul.f32 %v635, %v634
          %v637 = vmul.f32 %v636, %v635
          %v638 = vmul.f32 0.5, %v637
          %v639 = vsub.f32 1.5, %v638
          %v640 = vmul.f32 %v635, %v639
          %vm641 = vweird.f32 %v634
          %vm642 = vweird.f32 %v635
          %vm643 = vmor %vm641, %vm642
          %v644 = vsel %vm643, %v635, %v640
          %v645 = vmul.f32 %v628, %v644
          %v647 = vperm.slane %v622, 0
          %v649 = vmul.f32 %v645, %v647
          %v651 = vperm.slane %v623, 0
          %v653 = vadd.f32 %v649, %v651
          %vm654 = vcmp.ge.f32.partialorder %v653, 0.0
          %v655 = vmul.f32 %v653, 0.1
          %v656 = vsel %vm654, %v653, %v655
          %v657 = vpack.c.bf16 %v656, %v656
          %v658 = vld [vmem:[%s9] sm:$0xf]
          %v659 = vld [vmem:[%s10] sm:$0x3]
          %v661 = vsel %vm536, %v659, 0
          %663 = vmatpush.bf16.msra.mxu0 0
          %664 = vmatpush.bf16.msra.mxu0 0
          %665 = vmatpush.bf16.msra.mxu0 0
          %666 = vmatpush.bf16.msra.mxu0 0
          %667 = vmatpush.bf16.msra.mxu0 0
          %668 = vmatpush.bf16.msra.mxu0 0
          %669 = vmatpush.bf16.msra.mxu0 0
          %670 = vmatpush.bf16.msra.mxu0 %v661
          %671 = vmatmul.bf16.gmra.mxu0 %v534
          %v672 = vpop.f32.mrf.mxu0
          %v673 = vadd.f32 0.0, %v672
          %v674 = vpop.f32.mrf.mxu0
          %675 = vdwg.mxu0
          %v677 = vsel %vm602, %v657, 0
          %v680 = vsel %vm502, %v658, 0
          %682 = vmatpush.bf16.msra.mxu0 0
          %683 = vmatpush.bf16.msra.mxu0 0
          %684 = vmatpush.bf16.msra.mxu0 0
          %685 = vmatpush.bf16.msra.mxu0 0
          %686 = vmatpush.bf16.msra.mxu0 0
          %687 = vmatpush.bf16.msra.mxu0 0
          %688 = vmatpush.bf16.msra.mxu0 0
          %689 = vmatpush.bf16.msra.mxu0 %v680
          %690 = vmatmul.bf16.gmra.mxu0 %v677
          %v691 = vpop.f32.mrf.mxu0
          %v692 = vadd.f32 %v673, %v691
          %v693 = vpop.f32.mrf.mxu0
          %694 = vdwg.mxu0
          %v695 = vsel %vm519, %v692, 0.0
          %v696 = vrot.slane %v695, 4
          %v697 = vadd.f32 %v695, %v696
          %v698 = vrot.slane %v697, 2
          %v699 = vadd.f32 %v697, %v698
          %v700 = vrot.slane %v699, 1
          %v701 = vadd.f32 %v699, %v700
          %v702 = vrcp.pop 2.0
          %v703 = vmul.f32 2.0, %v702
          %v704 = vsub.f32 1.0, %v703
          %v705 = vmul.f32 %v702, %v704
          %v706 = vadd.f32 %v702, %v705
          %vm707 = vweird.f32 %v702
          %v708 = vsel %vm707, %v702, %v706
          %v709 = vmul.f32 %v701, %v708
          %v710 = vsub.f32 %v692, %v709
          %v711 = vmul.f32 %v710, %v710
          %v712 = vsel %vm519, %v711, 0.0
          %v713 = vrot.slane %v712, 4
          %v714 = vadd.f32 %v712, %v713
          %v715 = vrot.slane %v714, 2
          %v716 = vadd.f32 %v714, %v715
          %v717 = vrot.slane %v716, 1
          %v718 = vadd.f32 %v716, %v717
          %v719 = vmul.f32 %v718, %v708
          %v720 = vadd.f32 %v719, 1e-05
          %v721 = vrsqrt.pop %v720
          %v722 = vmul.f32 %v721, %v720
          %v723 = vmul.f32 %v722, %v721
          %v724 = vmul.f32 0.5, %v723
          %v725 = vsub.f32 1.5, %v724
          %v726 = vmul.f32 %v721, %v725
          %vm727 = vweird.f32 %v720
          %vm728 = vweird.f32 %v721
          %vm729 = vmor %vm727, %vm728
          %v730 = vsel %vm729, %v721, %v726
          %v731 = vmul.f32 %v710, %v730
          %v732 = vld [vmem:[%s11] sm:$0x1]
          %v734 = vperm.slane %v732, 0
          %v736 = vmul.f32 %v731, %v734
          %v737 = vld [vmem:[%s12] sm:$0x1]
          %v739 = vperm.slane %v737, 0
          %v741 = vadd.f32 %v736, %v739
          %742 = vst.msk [vmem:[#allocation11] sm:$0x3] %vm519, %v741
        $region96: #{tpu_custom_call.1} parent=71 // pred_fallthru
          _
        // Predicated region
        $region97: #{tpu_custom_call.1} parent=71 // pred_check
          %p743 = pneg %p321
        $region98: #{tpu_custom_call.1} parent=71 // pred_check_branch
          %745 = sbr.rel (%p743) target = $region100
        $region99: #{tpu_custom_call.1} parent=71 // pred_region
          %747 = vsyncadd [#allocation5], 0
          %s749 = sshll.u32 [#allocation11], 4
          %s750 = int_to_ptr.vmem [resolvable:$true] %s749
          %s751 = sshll.u32 %s13, 4
          %s752 = int_to_ptr.hbm [resolvable:$true] %s751
          %754 = dma.vmem_to_hbm [thread:$0]  %s750, 32, %s752, [#allocation5]
        $region100: #{tpu_custom_call.1} parent=71 // pred_fallthru
          _
        // Predicated region
        $region101: #{tpu_custom_call.1} parent=71 // pred_check
          %p755 = pneg %p321
        $region102: #{tpu_custom_call.1} parent=71 // pred_check_branch
          %757 = sbr.rel (%p755) target = $region104
        $region103: #{tpu_custom_call.1} parent=71 // pred_region
          %759 = dma.done [#allocation5], 32
        $region104: #{tpu_custom_call.1} parent=71 // pred_fallthru
          _
      $region72: #{tpu_custom_call.1} parent=5 // pred_fallthru
        _
      %p760 = scmp.le.s32.totalorder 2, %s25
      // Predicated region
      $region105: #{tpu_custom_call.1} parent=5 // pred_check
        %p761 = pneg %p760
      $region106: #{tpu_custom_call.1} parent=5 // pred_check_branch
        %763 = sbr.rel (%p761) target = $region108
      $region107: #{tpu_custom_call.1} parent=5 // pred_region
        %s764 = ssub.s32 %s25, 2
      $region108: #{tpu_custom_call.1} parent=5 // pred_fallthru
        _
    $region6: #{tpu_custom_call.1} parent=1 // loop_footer
      %s29 = sadd.s32 1, %s25
    $region7: #{tpu_custom_call.1} parent=1 // loop_footer_branch
      %24 = sbr.rel target = $region3
    $region8: #{tpu_custom_call.1} parent=1 // loop_exit
      _
    %765 = vsyncpa [#allocation4], 1
    %s766 = scalar_lea.sflag [#allocation4], 1
    %767 = vsyncpa %s766, 1
    %768 = vsyncpa [#allocation7], 1
    %769 = vsyncpa [#allocation10], 1
    %770 = vsyncpa [#allocation5], 1
    %s771 = scalar_lea.sflag [#allocation5], 1
    %772 = vsyncpa %s771, 1

</llo_original>
